<compile_context>
chip_gen: v7x
topology: tpu7x:2x2x1
jax: 0.10.0
libtpu: 0.0.40
codegen_flags: <defaults>
</compile_context>

<pallas_src>
import math

import jax
import jax.numpy as jnp
from jax.experimental import pallas as pl
from jax.experimental.pallas import tpu as pltpu


def _normalizer_kernel(x_ref, p_ref, o_ref):
    # p_ref: (2, lane_block) f32 -> row 0 = mean (lane-tiled), row 1 = inv_std.
    x = x_ref[...].astype(jnp.float32)
    mean = p_ref[0:1, :]       # (1, lane_block), broadcast over the row tile
    inv_std = p_ref[1:2, :]    # (1, lane_block)
    o_ref[...] = ((x - mean) * inv_std).astype(o_ref.dtype)


def _sublane_multiple(dtype):
    """Native sublane tile for the dtype (sub-32-bit dtypes pack sublanes)."""
    bits = jnp.dtype(dtype).itemsize * 8
    if bits >= 32:
        return 8
    if bits == 16:
        return 16
    return 32


def _fold_factor(N, D, target_lanes=512):
    """Smallest k with (k*D) % 128 == 0, widened toward target_lanes when that
    divides N (so widening never creates a ragged tail).  Wide feature dims
    are left unfolded and handled by lane tiling instead."""
    if D >= target_lanes:
        return 1
    k = 128 // math.gcd(D, 128)
    while (2 * k) * D <= target_lanes and N % (2 * k) == 0:
        k *= 2
    return k


def _budget_for_device():
    """(block_bytes, vmem_limit_bytes) per TPU generation."""
    kind = ""
    try:
        dev = jax.devices()[0]
        if dev.platform == "tpu":
            kind = dev.device_kind.lower()
    except Exception:
        pass
    if "v7" in kind:
        # ~3.2 TB/s HBM: amortize the ~0.35us step overhead with big blocks;
        # 4 double-buffered 6 MiB buffers need an explicit VMEM limit (64 MiB phys).
        return 6 * 1024 * 1024, 48 * 1024 * 1024
    if "v6" in kind:
        # 4 buffers * 4 MiB = 16 MiB, under the 32 MiB scoped default.
        return 4 * 1024 * 1024, None
    # v5e / unknown: conservative; 4 * 2 MiB = 8 MiB fits the 16 MiB default.
    return 2 * 1024 * 1024, None


def _normalize_ref(x2, mean_f32, inv_std_f32, out_dtype):
    """Plain-JAX normalization (used for the tiny ragged tail)."""
    return ((x2.astype(jnp.float32) - mean_f32) * inv_std_f32).astype(out_dtype)


def _round_up(v, m):
    return -(-v // m) * m


def normalizer_forward(x, mean, var, *, block_bytes=None, vmem_limit_bytes=None):
    """Pallas equivalent of Normalizer.forward.

    x:    (..., D)
    mean: (D,)
    var:  (D,)
    """
    D = mean.shape[0]
    assert x.shape[-1] == D, "last dim of x must equal normalizer dim"

    if block_bytes is None or vmem_limit_bytes is None:
        bb, vl = _budget_for_device()
        block_bytes = bb if block_bytes is None else block_bytes
        vmem_limit_bytes = vl if vmem_limit_bytes is None else vmem_limit_bytes

    # Match the PyTorch reference: arithmetic against f32 buffers promotes.
    out_dtype = jnp.promote_types(x.dtype, jnp.float32)

    mean_f32 = mean.astype(jnp.float32)
    # TODO(synk): the reference applies no epsilon; var==0 yields inf/nan here too.
    inv_std_f32 = (1.0 / jnp.sqrt(var)).astype(jnp.float32)

    orig_shape = x.shape
    x2 = x.reshape(-1, D)
    N = x2.shape[0]

    # ---- lane folding: fold k rows into the lane dim so L = k*D % 128 == 0 ----
    k = _fold_factor(N, D)
    N_main = (N // k) * k

    if N_main == 0:
        # Too few rows (or empty): plain JAX, no kernel launch.
        return _normalize_ref(x2, mean_f32, inv_std_f32, out_dtype).reshape(orig_shape)

    M = N_main // k
    L = k * D

    # ---- combined parameter block: [mean ; inv_std], tiled to L lanes, f32 ----
    params = jnp.stack([jnp.tile(mean_f32, k), jnp.tile(inv_std_f32, k)])

    # ---- tile sizing ------------------------------------------------------
    itemsize = jnp.dtype(x2.dtype).itemsize
    sub = _sublane_multiple(x2.dtype)

    # Lane tiling fallback for very wide feature dims: largest multiple of 128
    # such that a `sub`-row block stays within the byte budget.
    max_lanes = max(128, (block_bytes // (sub * itemsize) // 128) * 128)
    lane_block = L if L <= max_lanes else max_lanes
    n_lane_blocks = -(-L // lane_block)

    # Row tile from the per-block byte budget, rounded to the dtype's sublane tile.
    rows_budget = block_bytes // (lane_block * itemsize)
    row_block = max(sub, (rows_budget // sub) * sub)
    if row_block >= M:
        row_block = M
        if n_lane_blocks == 1 and M >= 2 * sub:
            # Keep >=2 (balanced) grid steps so both v7x TensorCores get work.
            row_block = _round_up(-(-M // 2), sub)

    grid = (-(-M // row_block), n_lane_blocks)   # ragged last blocks handled by Pallas

    cp_kwargs = dict(dimension_semantics=("parallel", "parallel"))
    if vmem_limit_bytes is not None:
        cp_kwargs["vmem_limit_bytes"] = vmem_limit_bytes

    xf = x2[:N_main].reshape(M, L)   # contiguous row-major fold (no data movement)

    out_main = pl.pallas_call(
        _normalizer_kernel,
        out_shape=jax.ShapeDtypeStruct((M, L), out_dtype),
        grid_spec=pltpu.PrefetchScalarGridSpec(
            num_scalar_prefetch=0,
            grid=grid,
            in_specs=[
                pl.BlockSpec((row_block, lane_block), lambda i, j: (i, j)),
                pl.BlockSpec((2, lane_block), lambda i, j: (0, j)),
            ],
            out_specs=pl.BlockSpec((row_block, lane_block), lambda i, j: (i, j)),
        ),
        compiler_params=pltpu.CompilerParams(**cp_kwargs),
    )(xf, params)

    out_main = out_main.reshape(N_main, D)

    if N_main == N:
        return out_main.reshape(orig_shape)

    # ---- ragged tail (< k rows): plain JAX, no x-sized pad/slice copies ----
    out_tail = _normalize_ref(x2[N_main:], mean_f32, inv_std_f32, out_dtype)
    out = jnp.concatenate([out_main, out_tail], axis=0)
    return out.reshape(orig_shape)


if __name__ == "__main__":
    key = jax.random.PRNGKey(0)
    k_fit, k_x = jax.random.split(key)

    dim = 32
    # Deterministically "fit" the normalizer buffers from synthetic data
    # (equivalent to Normalizer.fit; host-side buffer update, plain JAX).
    # TODO(synk): fit/update/count are running-stat buffer updates, kept in plain JAX.
    fit_data = jax.random.normal(k_fit, (64, dim), dtype=jnp.float32) * 2.5 + 1.0
    mean = jnp.mean(fit_data, axis=0)
    var = jnp.var(fit_data, axis=0, ddof=1)  # torch.var_mean uses unbiased var

    # Input: leading batch dims (2, 8), feature dim = 32.
    x = jax.random.normal(k_x, (2, 8, dim), dtype=jnp.float32) * 3.0 + 0.5

    out = jax.block_until_ready(normalizer_forward(x, mean, var))

    ref = (x - mean) / jnp.sqrt(var)
    assert out.shape == x.shape and out.dtype == jnp.float32
    assert jnp.allclose(out, ref, atol=1e-5, rtol=1e-5)

    # Exercise the ragged-tail path (N not a multiple of the fold factor):
    # main rows go through the kernel, the <k-row tail is normalized in JAX.
    x_odd = jax.random.normal(k_x, (5, dim), dtype=jnp.float32) * 2.0 - 1.0
    out_odd = jax.block_until_ready(normalizer_forward(x_odd, mean, var))
    ref_odd = (x_odd - mean) / jnp.sqrt(var)
    assert jnp.allclose(out_odd, ref_odd, atol=1e-5, rtol=1e-5)

    print("KERNEL_OK")
</pallas_src>

<mosaic_0001>
module attributes {stable_mosaic.version = 11 : i64} {
  func.func @_normalizer_kernel(%arg0: i32, %arg1: i32, %arg2: memref<1x512xf32, #tpu.memory_space<vmem>>, %arg3: memref<2x512xf32, #tpu.memory_space<vmem>>, %arg4: memref<1x512xf32, #tpu.memory_space<vmem>>) attributes {dimension_semantics = [#tpu.dimension_semantics<parallel>, #tpu.dimension_semantics<parallel>], iteration_bounds = array<i64: 1, 1>, scalar_prefetch = 0 : i64, scratch_operands = 0 : i64, tpu.core_type = #tpu.core_type<tc>, window_params = [{transform_indices = @transform_0, window_bounds = array<i64: 1, 512>}, {transform_indices = @transform_1, window_bounds = array<i64: 2, 512>}, {transform_indices = @transform_2, window_bounds = array<i64: 1, 512>}]} {
    %c0 = arith.constant 0 : index
    %c0_0 = arith.constant 0 : index
    %0 = vector.load %arg2[%c0, %c0_0] : memref<1x512xf32, #tpu.memory_space<vmem>>, vector<1x512xf32>
    %c0_1 = arith.constant 0 : index
    %c0_2 = arith.constant 0 : index
    %1 = vector.load %arg3[%c0_1, %c0_2] : memref<2x512xf32, #tpu.memory_space<vmem>>, vector<1x512xf32>
    %c1 = arith.constant 1 : index
    %c0_3 = arith.constant 0 : index
    %2 = vector.load %arg3[%c1, %c0_3] : memref<2x512xf32, #tpu.memory_space<vmem>>, vector<1x512xf32>
    %3 = arith.subf %0, %1 : vector<1x512xf32>
    %4 = arith.mulf %3, %2 : vector<1x512xf32>
    %c0_4 = arith.constant 0 : index
    %c0_5 = arith.constant 0 : index
    %5 = vector.load %arg4[%c0_4, %c0_5] : memref<1x512xf32, #tpu.memory_space<vmem>>, vector<1x512xf32>
    tpu.vector_store %arg4[%c0_4, %c0_5], %4 {strides = array<i32>} : memref<1x512xf32, #tpu.memory_space<vmem>>, vector<1x512xf32>,
    return
  }
  func.func @transform_0(%arg0: i32, %arg1: i32) -> (i32, i32) {
    %c0_i32 = arith.constant 0 : i32
    return %arg0, %arg1 : i32, i32
  }
  func.func @transform_1(%arg0: i32, %arg1: i32) -> (i32, i32) {
    %c0_i32 = arith.constant 0 : i32
    %c0_i32_0 = arith.constant 0 : i32
    return %c0_i32, %arg1 : i32, i32
  }
  func.func @transform_2(%arg0: i32, %arg1: i32) -> (i32, i32) {
    %c0_i32 = arith.constant 0 : i32
    return %arg0, %arg1 : i32, i32
  }
}

</mosaic_0001>

<llo_original>
// kernel: tpu_custom_call.1
$region0: #{tpu_custom_call.1}
  #allocation0 [shape = 'u32[]', space=smem, size = 0x4, offset = 0x4, fixed_abs, tag = 'smem constant byte address 0x4 - core index']
  #allocation1 [shape = 'u32[144,128]{1,0:T(1,128)}', space=vmem, size = 0x12000, scoped, tag = 'internal scratch']
  %s0 = inlined_call_operand.hbm [shape: f32[1,512], index: 0, kind: input, shape index: {}]
  %s1 = inlined_call_operand.hbm [shape: f32[2,512], index: 1, kind: input, shape index: {}]
  %s2 = inlined_call_operand.hbm [shape: f32[1,512], index: 2, kind: output, shape index: {}]
  %s3 = sld [smem:[#allocation0]]
  $region26: #{tpu_custom_call.1} parent=0
    _
  %s5 = ssub.s32 1, %s3
  %s6 = scalar_select 0, %s5, %s3
  $region1: #{tpu_custom_call.1} parent=0
    #allocation2 [shape = 'u8[2048]{0}', space=vmem, size = 0x800, scoped, tag = 'input window, operand 0, single buffered']
    #allocation3 [shape = 's32[1]{0}', space=sflag, size = 0x4, scoped, tag = 'scoped memory for tpu_custom_call.1']
    #allocation4 [shape = 's32[1]{0}', space=sflag, size = 0x4, scoped, tag = 'scoped memory for tpu_custom_call.1']
    #allocation5 [shape = 'u8[4096]{0}', space=vmem, size = 0x1000, scoped, tag = 'input window, operand 1, single buffered']
    #allocation6 [shape = 's32[1]{0}', space=sflag, size = 0x4, scoped, tag = 'scoped memory for tpu_custom_call.1']
    #allocation7 [shape = 'u8[2048]{0}', space=vmem, size = 0x800, scoped, tag = 'output window, operand 0, single buffered']
    %7 = vsyncpa [#allocation3], 0
    %8 = vsyncpa [#allocation6], 0
    %9 = vsyncpa [#allocation4], 0
    // Predicated region
    $region2: #{tpu_custom_call.1} parent=1 // pred_check
      _
    $region3: #{tpu_custom_call.1} parent=1 // pred_check_branch
      %11 = sbr.rel (0) target = $region5
    $region4: #{tpu_custom_call.1} parent=1 // pred_region
      %s13 = ssub.s32 64, 64
      %14 = vsyncadd [#allocation3], %s13
      %s16 = sshll.u32 [#allocation2], 4
      %s17 = int_to_ptr.vmem [resolvable:$true] %s16
      %19 = dma.hbm_to_vmem [thread:$0]  %s0, 64, %s17, [#allocation3]
    $region5: #{tpu_custom_call.1} parent=1 // pred_fallthru
      _
    // Predicated region
    $region6: #{tpu_custom_call.1} parent=1 // pred_check
      _
    $region7: #{tpu_custom_call.1} parent=1 // pred_check_branch
      %21 = sbr.rel (0) target = $region9
    $region8: #{tpu_custom_call.1} parent=1 // pred_region
      %s23 = ssub.s32 128, 128
      %24 = vsyncadd [#allocation6], %s23
      %s26 = sshll.u32 [#allocation5], 4
      %s27 = int_to_ptr.vmem [resolvable:$true] %s26
      %29 = dma.hbm_to_vmem [thread:$0]  %s1, 128, %s27, [#allocation6]
    $region9: #{tpu_custom_call.1} parent=1 // pred_fallthru
      _
    // Predicated region
    $region10: #{tpu_custom_call.1} parent=1 // pred_check
      _
    $region11: #{tpu_custom_call.1} parent=1 // pred_check_branch
      %31 = sbr.rel (0) target = $region13
    $region12: #{tpu_custom_call.1} parent=1 // pred_region
      %32 = dma.done [#allocation3], 64
    $region13: #{tpu_custom_call.1} parent=1 // pred_fallthru
      _
    // Predicated region
    $region14: #{tpu_custom_call.1} parent=1 // pred_check
      _
    $region15: #{tpu_custom_call.1} parent=1 // pred_check_branch
      %34 = sbr.rel (0) target = $region17
    $region16: #{tpu_custom_call.1} parent=1 // pred_region
      %35 = dma.done [#allocation6], 128
    $region17: #{tpu_custom_call.1} parent=1 // pred_fallthru
      _
    %v36 = vld [vmem:[#allocation2] sm:$0xf]
    %v37 = vld [vmem:[#allocation5] ss:$2 sm:$0xf]
    %s38 = scalar_lea.vmem [#allocation5], 1
    %v39 = vld [vmem:[%s38] ss:$2 sm:$0xf]
    %v40 = vsub.f32 %v36, %v37
    %v41 = vmul.f32 %v40, %v39
    %v42 = vlaneseq
    %vm43 = vcmp.ge.s32.totalorder %v42, 0
    %vm44 = vcmp.lt.s32.totalorder %v42, 512
    %vm45 = vmand %vm43, %vm44
    %46 = vst.msk [vmem:[#allocation7] sm:$0xf] %vm45, %v41
    // Predicated region
    $region18: #{tpu_custom_call.1} parent=1 // pred_check
      _
    $region19: #{tpu_custom_call.1} parent=1 // pred_check_branch
      %48 = sbr.rel (0) target = $region21
    $region20: #{tpu_custom_call.1} parent=1 // pred_region
      %s50 = ssub.s32 64, 64
      %51 = vsyncadd [#allocation4], %s50
      %s53 = sshll.u32 [#allocation7], 4
      %s54 = int_to_ptr.vmem [resolvable:$true] %s53
      %56 = dma.vmem_to_hbm [thread:$0]  %s54, 64, %s2, [#allocation4]
    $region21: #{tpu_custom_call.1} parent=1 // pred_fallthru
      _
    // Predicated region
    $region22: #{tpu_custom_call.1} parent=1 // pred_check
      _
    $region23: #{tpu_custom_call.1} parent=1 // pred_check_branch
      %58 = sbr.rel (0) target = $region25
    $region24: #{tpu_custom_call.1} parent=1 // pred_region
      %59 = dma.done [#allocation4], 64
    $region25: #{tpu_custom_call.1} parent=1 // pred_fallthru
      _
    %60 = vsyncpa [#allocation3], 1
    %61 = vsyncpa [#allocation6], 1
    %62 = vsyncpa [#allocation4], 1

</llo_original>
